<compile_context>
chip_gen: v7x
topology: tpu7x:2x2x1
jax: 0.10.0
libtpu: 0.0.40
codegen_flags: <defaults>
</compile_context>

<pallas_src>
import functools
import math

import jax
import jax.numpy as jnp
from jax.experimental import pallas as pl
from jax.experimental.pallas import tpu as pltpu


def _rmsnorm_kernel(x_ref, s_ref, o_ref, *, eps: float, inv_dim: float):
    # Upcast to f32 (matches x.float() in the PyTorch module).
    x = x_ref[...].astype(jnp.float32)                      # (tile_rows, dim)
    ms = jnp.sum(x * x, axis=-1, keepdims=True) * inv_dim   # mean over last dim
    inv = jax.lax.rsqrt(ms + eps)
    # s_ref already holds (1 + weight) in f32, precomputed in the wrapper.
    o_ref[...] = (x * inv * s_ref[...]).astype(o_ref.dtype)


def _physical_vmem_bytes() -> int:
    """Best-effort physical VMEM query; assume the smallest (v7x: 64 MiB/TC)."""
    try:
        return int(pltpu.get_tpu_info().vmem_capacity_bytes)
    except Exception:
        return 64 * 1024 * 1024


def _choose_tile_rows(rows: int, dim: int, itemsize: int) -> int:
    """Byte-targeted row tile: ~4 MiB input blocks, >=4 grid steps when possible."""
    # Per-row VMEM cost: double-buffered input + output blocks, plus ~3 live
    # f32 temporaries in the body (the f32 upcast, x*x, and the pre-cast
    # product) -> dim * (4*itemsize + 12) bytes.
    bytes_per_row = dim * (4 * itemsize + 12)

    # Conservative budget sized for v7x; grow on 128 MiB parts (v5e/v6e) only
    # when dim is so wide the tile would otherwise drop below ~128 rows.
    budget = 32 * 1024 * 1024
    if _physical_vmem_bytes() >= 96 * 1024 * 1024 and budget // bytes_per_row < 128:
        budget = 48 * 1024 * 1024

    # Target ~4 MiB input blocks (2-8 MiB sweet spot; benefit plateaus above),
    # bounded by the total-VMEM budget.
    target_in_block = 4 * 1024 * 1024
    t = max(1, target_in_block // max(dim * itemsize, 1))
    t = min(t, max(1, budget // bytes_per_row))

    # bf16 packs 16 rows per sublane group -> prefer multiples of 16 (min 8).
    if t >= 16:
        t = (t // 16) * 16
    else:
        t = 8

    # Aim for >= 4 grid steps (>= 2 blocks per v7x TensorCore) when rows allow,
    # so both cores get work and the prologue/epilogue DMAs overlap.
    min_steps = 4
    while t > 16 and -(-rows // t) < min_steps:
        t = max(16, ((t // 2) // 16) * 16)
    return t


def _rmsnorm_ref(x: jax.Array, weight: jax.Array, eps: float) -> jax.Array:
    xf = x.astype(jnp.float32)
    norm = xf * jax.lax.rsqrt(jnp.mean(xf * xf, axis=-1, keepdims=True) + eps)
    return (norm * (1.0 + weight.astype(jnp.float32))).astype(x.dtype)


def gemma_rms_norm(x: jax.Array, weight: jax.Array, eps: float = 1e-6,
                   tile_rows: int | None = None,
                   force_pallas: bool = False) -> jax.Array:
    """RMSNorm over the last axis of x, Gemma-style (scale = 1 + weight)."""
    orig_shape = x.shape
    dim = orig_shape[-1]
    assert weight.shape == (dim,)

    rows = math.prod(orig_shape[:-1]) if len(orig_shape) > 1 else 1
    itemsize = jnp.dtype(x.dtype).itemsize

    # Small-input / non-lane-dense fallback (see header).
    small = rows * dim * itemsize < (1 << 21) or rows < 16
    if not force_pallas and (small or dim % 128 != 0):
        return _rmsnorm_ref(x, weight, eps)

    x2d = x.reshape(rows, dim)
    # Hoist the (1 + weight) scale out of the kernel (single tiny XLA op).
    scale = (1.0 + weight.astype(jnp.float32)).reshape(1, dim)

    if tile_rows is None:
        tile_rows = _choose_tile_rows(rows, dim, itemsize)

    # TODO(synk): for extremely wide dim (where even an 8-row tile exceeds the
    # VMEM budget) tile the lane axis too (two-pass sum(x*x) accumulation).

    # vmem_limit from actual need (+~25%), capped at ~75% of physical VMEM so
    # Mosaic keeps headroom for internal scratch (matters on v7x); still set
    # explicitly so v5e's 16 MiB default scoped window doesn't reject the tile.
    in_block = tile_rows * dim * itemsize
    out_block = in_block
    temps = tile_rows * dim * 4 * 3
    need = 2 * in_block + 2 * out_block + temps + 2 * dim * 4
    vmem_limit = int(min(max(need * 5 // 4 + (1 << 20), 16 * 1024 * 1024),
                         _physical_vmem_bytes() * 3 // 4))

    grid = (pl.cdiv(rows, tile_rows),)

    out = pl.pallas_call(
        functools.partial(_rmsnorm_kernel, eps=eps, inv_dim=1.0 / dim),
        out_shape=jax.ShapeDtypeStruct((rows, dim), x.dtype),
        grid_spec=pltpu.PrefetchScalarGridSpec(
            num_scalar_prefetch=0,
            grid=grid,
            in_specs=[
                pl.BlockSpec((tile_rows, dim), lambda i: (i, 0)),
                pl.BlockSpec((1, dim), lambda i: (0, 0)),
            ],
            out_specs=pl.BlockSpec((tile_rows, dim), lambda i: (i, 0)),
        ),
        compiler_params=pltpu.CompilerParams(
            dimension_semantics=("parallel",),
            vmem_limit_bytes=vmem_limit,
        ),
    )(x2d, scale)

    return out.reshape(orig_shape)


if __name__ == "__main__":
    key = jax.random.PRNGKey(0)
    kx, kw, kx2, kw2, kx3, kw3 = jax.random.split(key, 6)

    # Case 1: small bf16 input, Pallas path forced (exercises the kernel).
    batch, seq, hidden = 2, 8, 256
    x = jax.random.normal(kx, (batch, seq, hidden), dtype=jnp.bfloat16)
    weight = (0.1 * jax.random.normal(kw, (hidden,))).astype(jnp.float32)

    out = gemma_rms_norm(x, weight, eps=1e-6, force_pallas=True)
    jax.block_until_ready(out)
    ref = _rmsnorm_ref(x, weight, 1e-6)
    assert out.shape == x.shape and out.dtype == x.dtype
    assert jnp.allclose(out.astype(jnp.float32), ref.astype(jnp.float32),
                        atol=1e-2, rtol=1e-2)

    # Case 2: ragged last block (rows=15 with tile_rows=8), f32, Pallas forced.
    batch2, seq2, hidden2 = 3, 5, 128
    x2 = jax.random.normal(kx2, (batch2, seq2, hidden2), dtype=jnp.float32)
    weight2 = (0.1 * jax.random.normal(kw2, (hidden2,))).astype(jnp.float32)

    out2 = gemma_rms_norm(x2, weight2, eps=1e-6, tile_rows=8, force_pallas=True)
    jax.block_until_ready(out2)
    ref2 = _rmsnorm_ref(x2, weight2, 1e-6)
    assert out2.shape == x2.shape and out2.dtype == x2.dtype
    assert jnp.allclose(out2, ref2, atol=1e-5, rtol=1e-5)

    # Case 3: tiny / non-128-multiple hidden -> pure-JAX fallback path.
    batch3, seq3, hidden3 = 2, 8, 32
    x3 = jax.random.normal(kx3, (batch3, seq3, hidden3), dtype=jnp.float32)
    weight3 = (0.1 * jax.random.normal(kw3, (hidden3,))).astype(jnp.float32)

    out3 = gemma_rms_norm(x3, weight3, eps=1e-6)
    jax.block_until_ready(out3)
    ref3 = _rmsnorm_ref(x3, weight3, 1e-6)
    assert out3.shape == x3.shape and out3.dtype == x3.dtype
    assert jnp.allclose(out3, ref3, atol=1e-5, rtol=1e-5)

    print("KERNEL_OK")
</pallas_src>

<mosaic_0001>
module attributes {stable_mosaic.version = 11 : i64} {
  func.func @_rmsnorm_kernel(%arg0: i32, %arg1: memref<16x256xbf16, #tpu.memory_space<vmem>>, %arg2: memref<1x256xf32, #tpu.memory_space<vmem>>, %arg3: memref<16x256xbf16, #tpu.memory_space<vmem>>) attributes {dimension_semantics = [#tpu.dimension_semantics<parallel>], iteration_bounds = array<i64: 1>, scalar_prefetch = 0 : i64, scratch_operands = 0 : i64, tpu.core_type = #tpu.core_type<tc>, window_params = [{transform_indices = @transform_0, window_bounds = array<i64: 16, 256>}, {pipeline_mode = #tpu.pipeline_mode<synchronous>, transform_indices = @transform_1, window_bounds = array<i64: 1, 256>}, {transform_indices = @transform_2, window_bounds = array<i64: 16, 256>}]} {
    %c0 = arith.constant 0 : index
    %c0_0 = arith.constant 0 : index
    %0 = vector.load %arg1[%c0, %c0_0] : memref<16x256xbf16, #tpu.memory_space<vmem>>, vector<16x256xbf16>
    %1 = arith.extf %0 : vector<16x256xbf16> to vector<16x256xf32>
    %2 = arith.mulf %1, %1 : vector<16x256xf32>
    %cst = arith.constant dense<0.000000e+00> : vector<16xf32>
    %3 = vector.multi_reduction <add>, %2, %cst [1] : vector<16x256xf32> to vector<16xf32>
    %4 = vector.shape_cast %3 : vector<16xf32> to vector<16x1xf32>
    %cst_1 = arith.constant 3.906250e-03 : f32
    %5 = vector.broadcast %cst_1 : f32 to vector<16x1xf32>
    %6 = arith.mulf %4, %5 : vector<16x1xf32>
    %cst_2 = arith.constant 9.99999997E-7 : f32
    %7 = vector.broadcast %cst_2 : f32 to vector<16x1xf32>
    %8 = arith.addf %6, %7 : vector<16x1xf32>
    %9 = math.rsqrt %8 : vector<16x1xf32>
    %10 = vector.broadcast %9 : vector<16x1xf32> to vector<16x256xf32>
    %11 = arith.mulf %1, %10 : vector<16x256xf32>
    %c0_3 = arith.constant 0 : index
    %c0_4 = arith.constant 0 : index
    %12 = vector.load %arg2[%c0_3, %c0_4] : memref<1x256xf32, #tpu.memory_space<vmem>>, vector<1x256xf32>
    %13 = vector.broadcast %12 : vector<1x256xf32> to vector<16x256xf32>
    %14 = arith.mulf %11, %13 : vector<16x256xf32>
    %15 = arith.truncf %14 : vector<16x256xf32> to vector<16x256xbf16>
    %c0_5 = arith.constant 0 : index
    %c0_6 = arith.constant 0 : index
    %16 = vector.load %arg3[%c0_5, %c0_6] : memref<16x256xbf16, #tpu.memory_space<vmem>>, vector<16x256xbf16>
    tpu.vector_store %arg3[%c0_5, %c0_6], %15 {strides = array<i32>} : memref<16x256xbf16, #tpu.memory_space<vmem>>, vector<16x256xbf16>,
    return
  }
  func.func @transform_0(%arg0: i32) -> (i32, i32) {
    %c0_i32 = arith.constant 0 : i32
    %c0_i32_0 = arith.constant 0 : i32
    return %arg0, %c0_i32 : i32, i32
  }
  func.func @transform_1(%arg0: i32) -> (i32, i32) {
    %c0_i32 = arith.constant 0 : i32
    %c0_i32_0 = arith.constant 0 : i32
    %c0_i32_1 = arith.constant 0 : i32
    return %c0_i32, %c0_i32_0 : i32, i32
  }
  func.func @transform_2(%arg0: i32) -> (i32, i32) {
    %c0_i32 = arith.constant 0 : i32
    %c0_i32_0 = arith.constant 0 : i32
    return %arg0, %c0_i32 : i32, i32
  }
}

</mosaic_0001>

<llo_original>
// kernel: tpu_custom_call.1
$region0: #{tpu_custom_call.1}
  #allocation0 [shape = 'u32[]', space=smem, size = 0x4, offset = 0x4, fixed_abs, tag = 'smem constant byte address 0x4 - core index']
  #allocation1 [shape = 'u32[144,128]{1,0:T(1,128)}', space=vmem, size = 0x12000, scoped, tag = 'internal scratch']
  %s0 = inlined_call_operand.hbm [shape: bf16[16,256], index: 0, kind: input, shape index: {}]
  %s1 = inlined_call_operand.vmem [shape: f32[1,256], index: 1, kind: input, shape index: {}]
  %s2 = inlined_call_operand.hbm [shape: bf16[16,256], index: 2, kind: output, shape index: {}]
  %s3 = sld [smem:[#allocation0]]
  $region22: #{tpu_custom_call.1} parent=0
    _
  %s5 = ssub.s32 1, %s3
  %s6 = scalar_select 0, %s5, %s3
  $region1: #{tpu_custom_call.1} parent=0
    #allocation2 [shape = 'u8[8192]{0}', space=vmem, size = 0x2000, scoped, tag = 'input window, operand 0, single buffered']
    #allocation3 [shape = 's32[1]{0}', space=sflag, size = 0x4, scoped, tag = 'scoped memory for tpu_custom_call.1']
    #allocation4 [shape = 's32[1]{0}', space=sflag, size = 0x4, scoped, tag = 'scoped memory for tpu_custom_call.1']
    #allocation5 [shape = 'u8[8192]{0}', space=vmem, size = 0x2000, scoped, tag = 'output window, operand 0, single buffered']
    %7 = vsyncpa [#allocation3], 0
    %8 = vsyncpa [#allocation4], 0
    // Predicated region
    $region2: #{tpu_custom_call.1} parent=1 // pred_check
      _
    $region3: #{tpu_custom_call.1} parent=1 // pred_check_branch
      %10 = sbr.rel (0) target = $region5
    $region4: #{tpu_custom_call.1} parent=1 // pred_region
      %s12 = ssub.s32 256, 256
      %13 = vsyncadd [#allocation3], %s12
      %s14 = sshll.u32 [#allocation2], 4
      %s15 = int_to_ptr.vmem [resolvable:$true] %s14
      %20 = dma.hbm_to_vmem [thread:$0]  %s0, 256, %s15, [#allocation3], 128, 128, 8
    $region5: #{tpu_custom_call.1} parent=1 // pred_fallthru
      _
    // Predicated region
    $region6: #{tpu_custom_call.1} parent=1 // pred_check
      _
    $region7: #{tpu_custom_call.1} parent=1 // pred_check_branch
      %22 = sbr.rel (0) target = $region9
    $region8: #{tpu_custom_call.1} parent=1 // pred_region
      _
    $region9: #{tpu_custom_call.1} parent=1 // pred_fallthru
      _
    // Predicated region
    $region10: #{tpu_custom_call.1} parent=1 // pred_check
      _
    $region11: #{tpu_custom_call.1} parent=1 // pred_check_branch
      %24 = sbr.rel (0) target = $region13
    $region12: #{tpu_custom_call.1} parent=1 // pred_region
      %25 = dma.done [#allocation3], 256
    $region13: #{tpu_custom_call.1} parent=1 // pred_fallthru
      _
    %v26 = vld [vmem:[#allocation2] sm:$0xff]
    %v27 = vld [vmem:[#allocation2 + $0x8] sm:$0xff]
    %v28 = vunpack.c.l.bf16 %v26
    %v29 = vunpack.c.h.bf16 %v26
    %v30 = vunpack.c.l.bf16 %v27
    %v31 = vunpack.c.h.bf16 %v27
    %v32 = vmul.f32 %v28, %v28
    %v33 = vmul.f32 %v29, %v29
    %v34 = vmul.f32 %v30, %v30
    %v35 = vmul.f32 %v31, %v31
    %v36 = vadd.f32 %v32, %v33
    %37 = vadd.xlane.f32.xlu0 %v36
    %v38 = vpop.xlane.xlu0 %37
    %v39 = vadd.f32 %v34, %v35
    %40 = vadd.xlane.f32.xlu0 %v39
    %v41 = vpop.xlane.xlu0 %40
    %v42 = vmul.f32 %v38, 0.00390625
    %v43 = vmul.f32 %v41, 0.00390625
    %v44 = vadd.f32 %v42, 1e-06
    %v45 = vadd.f32 %v43, 1e-06
    %v46 = vrsqrt.pop %v44
    %v47 = vrsqrt.pop %v45
    %v48 = vmul.f32 %v28, %v46
    %v49 = vmul.f32 %v29, %v46
    %v50 = vmul.f32 %v30, %v47
    %v51 = vmul.f32 %v31, %v47
    %v52 = vld [vmem:[%s1] sm:$0x3]
    %v54 = vlaneseq
    %v55 = vshrl.u32 %v54, 7
    %v56 = vsub.s32 0, %v55
    %v57 = vrot.slane %v52, %v56
    %v58 = vlaneseq
    %v59 = vshrl.u32 %v58, 7
    %v60 = vsub.s32 1, %v59
    %v61 = vrot.slane %v52, %v60
    %v64 = vmul.f32 %v48, %v57
    %v65 = vmul.f32 %v49, %v61
    %v66 = vmul.f32 %v50, %v57
    %v67 = vmul.f32 %v51, %v61
    %v68 = vpack.c.bf16 %v66, %v64
    %v69 = vpack.c.bf16 %v67, %v65
    %v72 = vunpack.c.l.b16 %v68
    %v73 = vunpack.c.l.b16 %v69
    %v74 = vunpack.c.h.b16 %v68
    %v75 = vunpack.c.h.b16 %v69
    %v76 = vpack.c.b16 %v73, %v72
    %v77 = vpack.c.b16 %v75, %v74
    %80 = vst [vmem:[#allocation5] sm:$0xff] %v76
    %81 = vst [vmem:[#allocation5 + $0x8] sm:$0xff] %v77
    // Predicated region
    $region14: #{tpu_custom_call.1} parent=1 // pred_check
      _
    $region15: #{tpu_custom_call.1} parent=1 // pred_check_branch
      %83 = sbr.rel (0) target = $region17
    $region16: #{tpu_custom_call.1} parent=1 // pred_region
      %s85 = ssub.s32 256, 256
      %86 = vsyncadd [#allocation4], %s85
      %s87 = sshll.u32 [#allocation5], 4
      %s88 = int_to_ptr.vmem [resolvable:$true] %s87
      %93 = dma.vmem_to_hbm [thread:$0]  %s88, 256, %s2, [#allocation4], 128, 128, 8
    $region17: #{tpu_custom_call.1} parent=1 // pred_fallthru
      _
    // Predicated region
    $region18: #{tpu_custom_call.1} parent=1 // pred_check
      _
    $region19: #{tpu_custom_call.1} parent=1 // pred_check_branch
      %95 = sbr.rel (0) target = $region21
    $region20: #{tpu_custom_call.1} parent=1 // pred_region
      %96 = dma.done [#allocation4], 256
    $region21: #{tpu_custom_call.1} parent=1 // pred_fallthru
      _
    %97 = vsyncpa [#allocation3], 1
    %98 = vsyncpa [#allocation4], 1

</llo_original>
